<compile_context>
chip_gen: v5e
topology: v5e:2x2
jax: 0.10.0
libtpu: 0.0.40
codegen_flags: <defaults>
</compile_context>

<pallas_src>
import functools

import jax
import jax.numpy as jnp
from jax import lax
from jax.experimental import pallas as pl
from jax.experimental.pallas import tpu as pltpu


def mlp_argmax_kernel(x_ref, w1_ref, b1_ref, w2t_ref, b2_ref, out_ref):
    xv = x_ref[...]
    w1 = w1_ref[...]
    if xv.dtype != w1.dtype:
        # f32-stream path: cast to the MXU compute dtype in-kernel (VPU, cheap,
        # hidden under the x DMA) so fc1 stays a single-pass bf16 matmul.
        xv = xv.astype(w1.dtype)

    # fc1 + bias + ReLU, f32 accumulation: (TB, 768) @ (768, 128) -> (TB, 128)
    h = jnp.dot(xv, w1, preferred_element_type=jnp.float32)
    h = jnp.maximum(h + b1_ref[...], 0.0)

    # fc2 computed transposed so the batch dim lands on lanes:
    #   logits_t = W2pad^T @ h^T -> (8, TB); rows 0/1 hold the two class logits.
    logits_t = lax.dot_general(
        w2t_ref[...], h,
        dimension_numbers=(((1,), (1,)), ((), ())),
        preferred_element_type=jnp.float32,
    ) + b2_ref[...]

    l0 = logits_t[0:1, :]
    l1 = logits_t[1:2, :]
    # Fused ReLU + argmax over 2 classes: relu(l1) > relu(l0)  <=>  l1 > max(l0, 0).
    out_ref[...] = (l1 > jnp.maximum(l0, 0.0)).astype(jnp.int32)  # (1, TB) lane-dense


def _pick_tile(rows, tb_cap):
    """Rows per grid step: multiple of 128, <= tb_cap, and >= 2 tiles whenever
    rows > 128 (so v7x's two TensorCores both get work), with small tail waste."""
    if rows <= 128:
        return 128
    tb = pl.cdiv(pl.cdiv(rows, 2), 128) * 128
    return int(max(128, min(tb_cap, tb)))


@functools.partial(jax.jit, static_argnames=("tb_cap", "compute_dtype", "cast_x"))
def model_forward(x, w1, b1, w2, b2, *, tb_cap=2048,
                  compute_dtype=jnp.bfloat16, cast_x=True):
    """x: (B, 768); w1: (768, 128); b1: (128,); w2: (128, 2); b2: (2,).

    Weights are stored pre-transposed vs. PyTorch (y = x @ W + b == nn.Linear).
    Returns int32 argmax per row (torch returns int64; values are identical).
    """
    B, D = x.shape
    H = w1.shape[1]

    if compute_dtype is not None:
        w1 = w1.astype(compute_dtype)
        if cast_x:
            # Halves the kernel's x HBM stream; under jit this fuses upstream.
            x = x.astype(compute_dtype)

    # Tiny-batch fallback only (cheap): avoid a block taller than the array.
    if B < 128:
        x = jnp.pad(x, ((0, 128 - B), (0, 0)))
    rows = x.shape[0]

    tb = _pick_tile(rows, tb_cap)
    num_tiles = int(pl.cdiv(rows, tb))   # last tile may be partial (no jnp.pad of x)

    b1_2d = b1.reshape(1, H)
    # Pad fc2 to an (8, H) MXU-friendly LHS; rows 0/1 hold the two output units.
    w2t_pad = jnp.zeros((8, H), w2.dtype).at[0:2, :].set(w2.T)
    b2_pad = jnp.zeros((8, 1), b2.dtype).at[0:2, 0].set(b2)

    x_tile_bytes = tb * D * x.dtype.itemsize
    weight_bytes = (w1.size * w1.dtype.itemsize + b1_2d.size * 4
                    + w2t_pad.size * 4 + b2_pad.size * 4)
    cost = pl.CostEstimate(
        flops=2 * rows * D * H + 2 * rows * H * 8,
        transcendentals=0,
        bytes_accessed=rows * D * x.dtype.itemsize + weight_bytes + num_tiles * tb * 4,
    )

    out = pl.pallas_call(
        mlp_argmax_kernel,
        out_shape=jax.ShapeDtypeStruct((1, num_tiles * tb), jnp.int32),
        grid=(num_tiles,),
        in_specs=[
            pl.BlockSpec((tb, D), lambda i: (i, 0)),    # x: streamed, double-buffered
            pl.BlockSpec((D, H), lambda i: (0, 0)),     # w1: VMEM-resident
            pl.BlockSpec((1, H), lambda i: (0, 0)),     # b1
            pl.BlockSpec((8, H), lambda i: (0, 0)),     # w2^T (zero-padded to 8 rows)
            pl.BlockSpec((8, 1), lambda i: (0, 0)),     # b2   (zero-padded column)
        ],
        out_specs=pl.BlockSpec((1, tb), lambda i: (0, i)),
        compiler_params=pltpu.CompilerParams(
            # TODO(synk): verify in xprof that "parallel" shards the batch grid across
            # v7x's 2 TCs; if not, switch to pltpu.CORE_PARALLEL / a core_map split.
            dimension_semantics=("parallel",),
            vmem_limit_bytes=int(min(48 << 20, 2 * x_tile_bytes + (16 << 20))),
        ),
        cost_estimate=cost,
    )(x, w1, b1_2d, w2t_pad, b2_pad)

    return out.reshape(-1)[:B]


def init_params(key):
    # Deterministic init mimicking nn.Linear's U(-1/sqrt(fan_in), 1/sqrt(fan_in)).
    k1, k2, k3, k4 = jax.random.split(key, 4)
    lim1 = 1.0 / jnp.sqrt(768.0)
    lim2 = 1.0 / jnp.sqrt(128.0)
    w1 = jax.random.uniform(k1, (768, 128), jnp.float32, -lim1, lim1)
    b1 = jax.random.uniform(k2, (128,), jnp.float32, -lim1, lim1)
    w2 = jax.random.uniform(k3, (128, 2), jnp.float32, -lim2, lim2)
    b2 = jax.random.uniform(k4, (2,), jnp.float32, -lim2, lim2)
    return w1, b1, w2, b2


def reference_f32(x, w1, b1, w2, b2):
    h = jnp.maximum(x @ w1 + b1, 0.0)
    logits = jnp.maximum(h @ w2 + b2, 0.0)
    return jnp.argmax(logits, axis=1).astype(jnp.int32)


def reference_bf16(x, w1, b1, w2, b2):
    # Same numerics as the kernel's bf16-input path (bf16 operands, f32 accumulate).
    h = jnp.dot(x.astype(jnp.bfloat16), w1.astype(jnp.bfloat16),
                preferred_element_type=jnp.float32)
    h = jnp.maximum(h + b1, 0.0)
    logits = jnp.maximum(h @ w2 + b2, 0.0)
    return jnp.argmax(logits, axis=1).astype(jnp.int32)


if __name__ == "__main__":
    key = jax.random.PRNGKey(0)
    kx, kx2, kp = jax.random.split(key, 3)
    w1, b1, w2, b2 = init_params(kp)

    # Case 1: tiny batch (exercises the <128 fallback pad, single tile), bf16 path.
    B = 8
    x = jax.random.normal(kx, (B, 768), jnp.float32)
    out = model_forward(x, w1, b1, w2, b2)
    jax.block_until_ready(out)
    ref = reference_bf16(x, w1, b1, w2, b2)
    assert out.shape == (B,)
    assert bool(jnp.all(out == ref))

    # Case 2: ragged multi-tile batch, no wrapper pad (partial boundary block path).
    B2 = 300
    x2 = jax.random.normal(kx2, (B2, 768), jnp.float32)
    out2 = model_forward(x2, w1, b1, w2, b2)
    jax.block_until_ready(out2)
    ref2 = reference_bf16(x2, w1, b1, w2, b2)
    assert out2.shape == (B2,)
    assert bool(jnp.all(out2 == ref2))

    # Case 3: f32 x stream with in-kernel bf16 cast (no boundary cast pass).
    out3 = model_forward(x2, w1, b1, w2, b2, cast_x=False)
    jax.block_until_ready(out3)
    assert bool(jnp.all(out3 == ref2))

    # Case 4: full-f32 compute path matches the plain f32 reference.
    out4 = model_forward(x2, w1, b1, w2, b2, compute_dtype=None)
    jax.block_until_ready(out4)
    ref4 = reference_f32(x2, w1, b1, w2, b2)
    assert bool(jnp.all(out4 == ref4))

    print("KERNEL_OK")
</pallas_src>

<mosaic_0001>
module attributes {stable_mosaic.version = 11 : i64} {
  func.func @mlp_argmax_kernel(%arg0: i32, %arg1: memref<128x768xbf16, #tpu.memory_space<vmem>>, %arg2: memref<768x128xbf16, #tpu.memory_space<vmem>>, %arg3: memref<1x128xf32, #tpu.memory_space<vmem>>, %arg4: memref<8x128xf32, #tpu.memory_space<vmem>>, %arg5: memref<8x1xf32, #tpu.memory_space<vmem>>, %arg6: memref<1x128xi32, #tpu.memory_space<vmem>>) attributes {dimension_semantics = [#tpu.dimension_semantics<parallel>], iteration_bounds = array<i64: 1>, scalar_prefetch = 0 : i64, scratch_operands = 0 : i64, tpu.core_type = #tpu.core_type<tc>, window_params = [{transform_indices = @transform_0, window_bounds = array<i64: 128, 768>}, {pipeline_mode = #tpu.pipeline_mode<synchronous>, transform_indices = @transform_1, window_bounds = array<i64: 768, 128>}, {pipeline_mode = #tpu.pipeline_mode<synchronous>, transform_indices = @transform_2, window_bounds = array<i64: 1, 128>}, {pipeline_mode = #tpu.pipeline_mode<synchronous>, transform_indices = @transform_3, window_bounds = array<i64: 8, 128>}, {pipeline_mode = #tpu.pipeline_mode<synchronous>, transform_indices = @transform_4, window_bounds = array<i64: 8, 1>}, {transform_indices = @transform_5, window_bounds = array<i64: 1, 128>}]} {
    %c0 = arith.constant 0 : index
    %c0_0 = arith.constant 0 : index
    %0 = vector.load %arg1[%c0, %c0_0] : memref<128x768xbf16, #tpu.memory_space<vmem>>, vector<128x768xbf16>
    %c0_1 = arith.constant 0 : index
    %c0_2 = arith.constant 0 : index
    %1 = vector.load %arg2[%c0_1, %c0_2] : memref<768x128xbf16, #tpu.memory_space<vmem>>, vector<768x128xbf16>
    %cst = arith.constant dense<0.000000e+00> : vector<128x128xf32>
    %2 = tpu.matmul %0, %1, %cst {dimension_numbers = #tpu.dot_dimension_numbers<[1], [0], [0], [1], [0, 0, 1, 1], [], []>} : vector<128x768xbf16>, vector<768x128xbf16>, vector<128x128xf32> -> vector<128x128xf32>
    %c0_3 = arith.constant 0 : index
    %c0_4 = arith.constant 0 : index
    %3 = vector.load %arg3[%c0_3, %c0_4] : memref<1x128xf32, #tpu.memory_space<vmem>>, vector<1x128xf32>
    %4 = vector.broadcast %3 : vector<1x128xf32> to vector<128x128xf32>
    %5 = arith.addf %2, %4 : vector<128x128xf32>
    %cst_5 = arith.constant 0.000000e+00 : f32
    %6 = vector.broadcast %cst_5 : f32 to vector<128x128xf32>
    %7 = arith.maximumf %5, %6 : vector<128x128xf32>
    %c0_6 = arith.constant 0 : index
    %c0_7 = arith.constant 0 : index
    %8 = vector.load %arg4[%c0_6, %c0_7] : memref<8x128xf32, #tpu.memory_space<vmem>>, vector<8x128xf32>
    %cst_8 = arith.constant dense<0.000000e+00> : vector<8x128xf32>
    %9 = tpu.matmul %8, %7, %cst_8 {dimension_numbers = #tpu.dot_dimension_numbers<[1], [1], [0], [0], [0, 0, 1, 0], [], []>} : vector<8x128xf32>, vector<128x128xf32>, vector<8x128xf32> -> vector<8x128xf32>
    %c0_9 = arith.constant 0 : index
    %c0_10 = arith.constant 0 : index
    %10 = vector.load %arg5[%c0_9, %c0_10] : memref<8x1xf32, #tpu.memory_space<vmem>>, vector<8x1xf32>
    %11 = vector.broadcast %10 : vector<8x1xf32> to vector<8x128xf32>
    %12 = arith.addf %9, %11 : vector<8x128xf32>
    %13 = vector.extract_strided_slice %12 {offsets = [0, 0], sizes = [1, 128], strides = [1, 1]} : vector<8x128xf32> to vector<1x128xf32>
    %14 = vector.extract_strided_slice %12 {offsets = [1, 0], sizes = [1, 128], strides = [1, 1]} : vector<8x128xf32> to vector<1x128xf32>
    %cst_11 = arith.constant 0.000000e+00 : f32
    %15 = vector.broadcast %cst_11 : f32 to vector<1x128xf32>
    %16 = arith.maximumf %13, %15 : vector<1x128xf32>
    %17 = arith.cmpf ogt, %14, %16 : vector<1x128xf32>
    %18 = arith.extui %17 : vector<1x128xi1> to vector<1x128xi32>
    %c0_12 = arith.constant 0 : index
    %c0_13 = arith.constant 0 : index
    %19 = vector.load %arg6[%c0_12, %c0_13] : memref<1x128xi32, #tpu.memory_space<vmem>>, vector<1x128xi32>
    tpu.vector_store %arg6[%c0_12, %c0_13], %18 {strides = array<i32>} : memref<1x128xi32, #tpu.memory_space<vmem>>, vector<1x128xi32>,
    return
  }
  func.func @transform_0(%arg0: i32) -> (i32, i32) {
    %c0_i32 = arith.constant 0 : i32
    %c0_i32_0 = arith.constant 0 : i32
    return %arg0, %c0_i32 : i32, i32
  }
  func.func @transform_1(%arg0: i32) -> (i32, i32) {
    %c0_i32 = arith.constant 0 : i32
    %c0_i32_0 = arith.constant 0 : i32
    %c0_i32_1 = arith.constant 0 : i32
    return %c0_i32, %c0_i32_0 : i32, i32
  }
  func.func @transform_2(%arg0: i32) -> (i32, i32) {
    %c0_i32 = arith.constant 0 : i32
    %c0_i32_0 = arith.constant 0 : i32
    %c0_i32_1 = arith.constant 0 : i32
    return %c0_i32, %c0_i32_0 : i32, i32
  }
  func.func @transform_3(%arg0: i32) -> (i32, i32) {
    %c0_i32 = arith.constant 0 : i32
    %c0_i32_0 = arith.constant 0 : i32
    %c0_i32_1 = arith.constant 0 : i32
    return %c0_i32, %c0_i32_0 : i32, i32
  }
  func.func @transform_4(%arg0: i32) -> (i32, i32) {
    %c0_i32 = arith.constant 0 : i32
    %c0_i32_0 = arith.constant 0 : i32
    %c0_i32_1 = arith.constant 0 : i32
    return %c0_i32, %c0_i32_0 : i32, i32
  }
  func.func @transform_5(%arg0: i32) -> (i32, i32) {
    %c0_i32 = arith.constant 0 : i32
    %c0_i32_0 = arith.constant 0 : i32
    return %c0_i32, %arg0 : i32, i32
  }
}

</mosaic_0001>

<llo_original>
// kernel: model_forward.1
$region0: #{model_forward.1}
  #allocation0 [shape = 'u32[]', space=smem, size = 0x4, offset = 0x4, fixed_abs, tag = 'smem constant byte address 0x4 - core index']
  #allocation1 [shape = 'u32[72,128]{1,0:T(1,128)}', space=vmem, size = 0x9000, scoped, tag = 'internal scratch']
  %s0 = inlined_call_operand.vmem [shape: bf16[128,768], index: 0, kind: input, shape index: {}]
  %s1 = inlined_call_operand.vmem [shape: bf16[768,128], index: 1, kind: input, shape index: {}]
  %s2 = inlined_call_operand.vmem [shape: f32[1,128], index: 2, kind: input, shape index: {}]
  %s3 = inlined_call_operand.vmem [shape: f32[8,128], index: 3, kind: input, shape index: {}]
  %s4 = inlined_call_operand.vmem [shape: f32[8,1], index: 4, kind: input, shape index: {}]
  %s5 = inlined_call_operand.vmem [shape: s32[1,128], index: 5, kind: output, shape index: {}]
  %s6 = sld [smem:[#allocation0]]
  $region30: #{model_forward.1} parent=0
    _
  %s8 = ssub.s32 1, %s6
  %s9 = scalar_select 0, %s8, %s6
  // Predicated region
  $region2: #{model_forward.1} parent=0 // pred_check
    _
  $region3: #{model_forward.1} parent=0 // pred_check_branch
    %11 = sbr.rel (0) target = $region5
  $region4: #{model_forward.1} parent=0 // pred_region
    _
  $region5: #{model_forward.1} parent=0 // pred_fallthru
    _
  // Predicated region
  $region6: #{model_forward.1} parent=0 // pred_check
    _
  $region7: #{model_forward.1} parent=0 // pred_check_branch
    %13 = sbr.rel (0) target = $region9
  $region8: #{model_forward.1} parent=0 // pred_region
    _
  $region9: #{model_forward.1} parent=0 // pred_fallthru
    _
  // Predicated region
  $region10: #{model_forward.1} parent=0 // pred_check
    _
  $region11: #{model_forward.1} parent=0 // pred_check_branch
    %15 = sbr.rel (0) target = $region13
  $region12: #{model_forward.1} parent=0 // pred_region
    _
  $region13: #{model_forward.1} parent=0 // pred_fallthru
    _
  // Predicated region
  $region14: #{model_forward.1} parent=0 // pred_check
    _
  $region15: #{model_forward.1} parent=0 // pred_check_branch
    %17 = sbr.rel (0) target = $region17
  $region16: #{model_forward.1} parent=0 // pred_region
    _
  $region17: #{model_forward.1} parent=0 // pred_fallthru
    _
  // Predicated region
  $region18: #{model_forward.1} parent=0 // pred_check
    _
  $region19: #{model_forward.1} parent=0 // pred_check_branch
    %19 = sbr.rel (0) target = $region21
  $region20: #{model_forward.1} parent=0 // pred_region
    _
  $region21: #{model_forward.1} parent=0 // pred_fallthru
    _
  %v20 = vld [vmem:[%s0] sm:$0xff]
  %v21 = vld [vmem:[%s0 + $0x8] sm:$0xff]
  %v22 = vld [vmem:[%s0 + $0x10] sm:$0xff]
  %v23 = vld [vmem:[%s0 + $0x18] sm:$0xff]
  %v24 = vld [vmem:[%s0 + $0x20] sm:$0xff]
  %v25 = vld [vmem:[%s0 + $0x28] sm:$0xff]
  %v26 = vld [vmem:[%s0 + $0x30] sm:$0xff]
  %v27 = vld [vmem:[%s0 + $0x38] sm:$0xff]
  %v28 = vld [vmem:[%s0 + $0x40] sm:$0xff]
  %v29 = vld [vmem:[%s0 + $0x48] sm:$0xff]
  %v30 = vld [vmem:[%s0 + $0x50] sm:$0xff]
  %v31 = vld [vmem:[%s0 + $0x58] sm:$0xff]
  %v32 = vld [vmem:[%s0 + $0x60] sm:$0xff]
  %v33 = vld [vmem:[%s0 + $0x68] sm:$0xff]
  %v34 = vld [vmem:[%s0 + $0x70] sm:$0xff]
  %v35 = vld [vmem:[%s0 + $0x78] sm:$0xff]
  %v36 = vld [vmem:[%s0 + $0x80] sm:$0xff]
  %v37 = vld [vmem:[%s0 + $0x88] sm:$0xff]
  %v38 = vld [vmem:[%s0 + $0x90] sm:$0xff]
  %v39 = vld [vmem:[%s0 + $0x98] sm:$0xff]
  %v40 = vld [vmem:[%s0 + $0xa0] sm:$0xff]
  %v41 = vld [vmem:[%s0 + $0xa8] sm:$0xff]
  %v42 = vld [vmem:[%s0 + $0xb0] sm:$0xff]
  %v43 = vld [vmem:[%s0 + $0xb8] sm:$0xff]
  %v44 = vld [vmem:[%s0 + $0xc0] sm:$0xff]
  %v45 = vld [vmem:[%s0 + $0xc8] sm:$0xff]
  %v46 = vld [vmem:[%s0 + $0xd0] sm:$0xff]
  %v47 = vld [vmem:[%s0 + $0xd8] sm:$0xff]
  %v48 = vld [vmem:[%s0 + $0xe0] sm:$0xff]
  %v49 = vld [vmem:[%s0 + $0xe8] sm:$0xff]
  %v50 = vld [vmem:[%s0 + $0xf0] sm:$0xff]
  %v51 = vld [vmem:[%s0 + $0xf8] sm:$0xff]
  %v52 = vld [vmem:[%s0 + $0x100] sm:$0xff]
  %v53 = vld [vmem:[%s0 + $0x108] sm:$0xff]
  %v54 = vld [vmem:[%s0 + $0x110] sm:$0xff]
  %v55 = vld [vmem:[%s0 + $0x118] sm:$0xff]
  %v56 = vld [vmem:[%s0 + $0x120] sm:$0xff]
  %v57 = vld [vmem:[%s0 + $0x128] sm:$0xff]
  %v58 = vld [vmem:[%s0 + $0x130] sm:$0xff]
  %v59 = vld [vmem:[%s0 + $0x138] sm:$0xff]
  %v60 = vld [vmem:[%s0 + $0x140] sm:$0xff]
  %v61 = vld [vmem:[%s0 + $0x148] sm:$0xff]
  %v62 = vld [vmem:[%s0 + $0x150] sm:$0xff]
  %v63 = vld [vmem:[%s0 + $0x158] sm:$0xff]
  %v64 = vld [vmem:[%s0 + $0x160] sm:$0xff]
  %v65 = vld [vmem:[%s0 + $0x168] sm:$0xff]
  %v66 = vld [vmem:[%s0 + $0x170] sm:$0xff]
  %v67 = vld [vmem:[%s0 + $0x178] sm:$0xff]
  %v68 = vld [vmem:[%s1] sm:$0xf]
  %v69 = vld [vmem:[%s1 + $0x4] sm:$0xf]
  %v70 = vld [vmem:[%s1 + $0x8] sm:$0xf]
  %v71 = vld [vmem:[%s1 + $0xc] sm:$0xf]
  %v72 = vld [vmem:[%s1 + $0x10] sm:$0xf]
  %v73 = vld [vmem:[%s1 + $0x14] sm:$0xf]
  %v74 = vld [vmem:[%s1 + $0x18] sm:$0xf]
  %v75 = vld [vmem:[%s1 + $0x1c] sm:$0xf]
  %v76 = vld [vmem:[%s1 + $0x20] sm:$0xf]
  %v77 = vld [vmem:[%s1 + $0x24] sm:$0xf]
  %v78 = vld [vmem:[%s1 + $0x28] sm:$0xf]
  %v79 = vld [vmem:[%s1 + $0x2c] sm:$0xf]
  %v80 = vld [vmem:[%s1 + $0x30] sm:$0xf]
  %v81 = vld [vmem:[%s1 + $0x34] sm:$0xf]
  %v82 = vld [vmem:[%s1 + $0x38] sm:$0xf]
  %v83 = vld [vmem:[%s1 + $0x3c] sm:$0xf]
  %v84 = vld [vmem:[%s1 + $0x40] sm:$0xf]
  %v85 = vld [vmem:[%s1 + $0x44] sm:$0xf]
  %v86 = vld [vmem:[%s1 + $0x48] sm:$0xf]
  %v87 = vld [vmem:[%s1 + $0x4c] sm:$0xf]
  %v88 = vld [vmem:[%s1 + $0x50] sm:$0xf]
  %v89 = vld [vmem:[%s1 + $0x54] sm:$0xf]
  %v90 = vld [vmem:[%s1 + $0x58] sm:$0xf]
  %v91 = vld [vmem:[%s1 + $0x5c] sm:$0xf]
  %v92 = vld [vmem:[%s1 + $0x60] sm:$0xf]
  %v93 = vld [vmem:[%s1 + $0x64] sm:$0xf]
  %v94 = vld [vmem:[%s1 + $0x68] sm:$0xf]
  %v95 = vld [vmem:[%s1 + $0x6c] sm:$0xf]
  %v96 = vld [vmem:[%s1 + $0x70] sm:$0xf]
  %v97 = vld [vmem:[%s1 + $0x74] sm:$0xf]
  %v98 = vld [vmem:[%s1 + $0x78] sm:$0xf]
  %v99 = vld [vmem:[%s1 + $0x7c] sm:$0xf]
  %v100 = vld [vmem:[%s1 + $0x80] sm:$0xf]
  %v101 = vld [vmem:[%s1 + $0x84] sm:$0xf]
  %v102 = vld [vmem:[%s1 + $0x88] sm:$0xf]
  %v103 = vld [vmem:[%s1 + $0x8c] sm:$0xf]
  %v104 = vld [vmem:[%s1 + $0x90] sm:$0xf]
  %v105 = vld [vmem:[%s1 + $0x94] sm:$0xf]
  %v106 = vld [vmem:[%s1 + $0x98] sm:$0xf]
  %v107 = vld [vmem:[%s1 + $0x9c] sm:$0xf]
  %v108 = vld [vmem:[%s1 + $0xa0] sm:$0xf]
  %v109 = vld [vmem:[%s1 + $0xa4] sm:$0xf]
  %v110 = vld [vmem:[%s1 + $0xa8] sm:$0xf]
  %v111 = vld [vmem:[%s1 + $0xac] sm:$0xf]
  %v112 = vld [vmem:[%s1 + $0xb0] sm:$0xf]
  %v113 = vld [vmem:[%s1 + $0xb4] sm:$0xf]
  %v114 = vld [vmem:[%s1 + $0xb8] sm:$0xf]
  %v115 = vld [vmem:[%s1 + $0xbc] sm:$0xf]
  %v116 = vld [vmem:[%s1 + $0xc0] sm:$0xf]
  %v117 = vld [vmem:[%s1 + $0xc4] sm:$0xf]
  %v118 = vld [vmem:[%s1 + $0xc8] sm:$0xf]
  %v119 = vld [vmem:[%s1 + $0xcc] sm:$0xf]
  %v120 = vld [vmem:[%s1 + $0xd0] sm:$0xf]
  %v121 = vld [vmem:[%s1 + $0xd4] sm:$0xf]
  %v122 = vld [vmem:[%s1 + $0xd8] sm:$0xf]
  %v123 = vld [vmem:[%s1 + $0xdc] sm:$0xf]
  %v124 = vld [vmem:[%s1 + $0xe0] sm:$0xf]
  %v125 = vld [vmem:[%s1 + $0xe4] sm:$0xf]
  %v126 = vld [vmem:[%s1 + $0xe8] sm:$0xf]
  %v127 = vld [vmem:[%s1 + $0xec] sm:$0xf]
  %v128 = vld [vmem:[%s1 + $0xf0] sm:$0xf]
  %v129 = vld [vmem:[%s1 + $0xf4] sm:$0xf]
  %v130 = vld [vmem:[%s1 + $0xf8] sm:$0xf]
  %v131 = vld [vmem:[%s1 + $0xfc] sm:$0xf]
  %v132 = vld [vmem:[%s1 + $0x100] sm:$0xf]
  %v133 = vld [vmem:[%s1 + $0x104] sm:$0xf]
  %v134 = vld [vmem:[%s1 + $0x108] sm:$0xf]
  %v135 = vld [vmem:[%s1 + $0x10c] sm:$0xf]
  %v136 = vld [vmem:[%s1 + $0x110] sm:$0xf]
  %v137 = vld [vmem:[%s1 + $0x114] sm:$0xf]
  %v138 = vld [vmem:[%s1 + $0x118] sm:$0xf]
  %v139 = vld [vmem:[%s1 + $0x11c] sm:$0xf]
  %v140 = vld [vmem:[%s1 + $0x120] sm:$0xf]
  %v141 = vld [vmem:[%s1 + $0x124] sm:$0xf]
  %v142 = vld [vmem:[%s1 + $0x128] sm:$0xf]
  %v143 = vld [vmem:[%s1 + $0x12c] sm:$0xf]
  %v144 = vld [vmem:[%s1 + $0x130] sm:$0xf]
  %v145 = vld [vmem:[%s1 + $0x134] sm:$0xf]
  %v146 = vld [vmem:[%s1 + $0x138] sm:$0xf]
  %v147 = vld [vmem:[%s1 + $0x13c] sm:$0xf]
  %v148 = vld [vmem:[%s1 + $0x140] sm:$0xf]
  %v149 = vld [vmem:[%s1 + $0x144] sm:$0xf]
  %v150 = vld [vmem:[%s1 + $0x148] sm:$0xf]
  %v151 = vld [vmem:[%s1 + $0x14c] sm:$0xf]
  %v152 = vld [vmem:[%s1 + $0x150] sm:$0xf]
  %v153 = vld [vmem:[%s1 + $0x154] sm:$0xf]
  %v154 = vld [vmem:[%s1 + $0x158] sm:$0xf]
  %v155 = vld [vmem:[%s1 + $0x15c] sm:$0xf]
  %v156 = vld [vmem:[%s1 + $0x160] sm:$0xf]
  %v157 = vld [vmem:[%s1 + $0x164] sm:$0xf]
  %v158 = vld [vmem:[%s1 + $0x168] sm:$0xf]
  %v159 = vld [vmem:[%s1 + $0x16c] sm:$0xf]
  %v160 = vld [vmem:[%s1 + $0x170] sm:$0xf]
  %v161 = vld [vmem:[%s1 + $0x174] sm:$0xf]
  %v162 = vld [vmem:[%s1 + $0x178] sm:$0xf]
  %v163 = vld [vmem:[%s1 + $0x17c] sm:$0xf]
  %v164 = vld [vmem:[%s2] sm:$0x1]
  %v166 = vperm.slane %v164, 0
  %v216 = vunpack.c.l.b16 %v20
  %v217 = vunpack.c.h.b16 %v20
  %v218 = vunpack.c.l.b16 %v21
  %v219 = vunpack.c.h.b16 %v21
  %v220 = vunpack.c.l.b16 %v22
  %v221 = vunpack.c.h.b16 %v22
  %v222 = vunpack.c.l.b16 %v23
  %v223 = vunpack.c.h.b16 %v23
  %v224 = vunpack.c.l.b16 %v24
  %v225 = vunpack.c.h.b16 %v24
  %v226 = vunpack.c.l.b16 %v25
  %v227 = vunpack.c.h.b16 %v25
  %v228 = vunpack.c.l.b16 %v26
  %v229 = vunpack.c.h.b16 %v26
  %v230 = vunpack.c.l.b16 %v27
  %v231 = vunpack.c.h.b16 %v27
  %v232 = vunpack.c.l.b16 %v28
  %v233 = vunpack.c.h.b16 %v28
  %v234 = vunpack.c.l.b16 %v29
  %v235 = vunpack.c.h.b16 %v29
  %v236 = vunpack.c.l.b16 %v30
  %v237 = vunpack.c.h.b16 %v30
  %v238 = vunpack.c.l.b16 %v31
  %v239 = vunpack.c.h.b16 %v31
  %v240 = vunpack.c.l.b16 %v32
  %v241 = vunpack.c.h.b16 %v32
  %v242 = vunpack.c.l.b16 %v33
  %v243 = vunpack.c.h.b16 %v33
  %v244 = vunpack.c.l.b16 %v34
  %v245 = vunpack.c.h.b16 %v34
  %v246 = vunpack.c.l.b16 %v35
  %v247 = vunpack.c.h.b16 %v35
  %v248 = vunpack.c.l.b16 %v36
  %v249 = vunpack.c.h.b16 %v36
  %v250 = vunpack.c.l.b16 %v37
  %v251 = vunpack.c.h.b16 %v37
  %v252 = vunpack.c.l.b16 %v38
  %v253 = vunpack.c.h.b16 %v38
  %v254 = vunpack.c.l.b16 %v39
  %v255 = vunpack.c.h.b16 %v39
  %v256 = vunpack.c.l.b16 %v40
  %v257 = vunpack.c.h.b16 %v40
  %v258 = vunpack.c.l.b16 %v41
  %v259 = vunpack.c.h.b16 %v41
  %v260 = vunpack.c.l.b16 %v42
  %v261 = vunpack.c.h.b16 %v42
  %v262 = vunpack.c.l.b16 %v43
  %v263 = vunpack.c.h.b16 %v43
  %v264 = vunpack.c.l.b16 %v44
  %v265 = vunpack.c.h.b16 %v44
  %v266 = vunpack.c.l.b16 %v45
  %v267 = vunpack.c.h.b16 %v45
  %v268 = vunpack.c.l.b16 %v46
  %v269 = vunpack.c.h.b16 %v46
  %v270 = vunpack.c.l.b16 %v47
  %v271 = vunpack.c.h.b16 %v47
  %v272 = vunpack.c.l.b16 %v48
  %v273 = vunpack.c.h.b16 %v48
  %v274 = vunpack.c.l.b16 %v49
  %v275 = vunpack.c.h.b16 %v49
  %v276 = vunpack.c.l.b16 %v50
  %v277 = vunpack.c.h.b16 %v50
  %v278 = vunpack.c.l.b16 %v51
  %v279 = vunpack.c.h.b16 %v51
  %v280 = vunpack.c.l.b16 %v52
  %v281 = vunpack.c.h.b16 %v52
  %v282 = vunpack.c.l.b16 %v53
  %v283 = vunpack.c.h.b16 %v53
  %v284 = vunpack.c.l.b16 %v54
  %v285 = vunpack.c.h.b16 %v54
  %v286 = vunpack.c.l.b16 %v55
  %v287 = vunpack.c.h.b16 %v55
  %v288 = vunpack.c.l.b16 %v56
  %v289 = vunpack.c.h.b16 %v56
  %v290 = vunpack.c.l.b16 %v57
  %v291 = vunpack.c.h.b16 %v57
  %v292 = vunpack.c.l.b16 %v58
  %v293 = vunpack.c.h.b16 %v58
  %v294 = vunpack.c.l.b16 %v59
  %v295 = vunpack.c.h.b16 %v59
  %v296 = vunpack.c.l.b16 %v60
  %v297 = vunpack.c.h.b16 %v60
  %v298 = vunpack.c.l.b16 %v61
  %v299 = vunpack.c.h.b16 %v61
  %v300 = vunpack.c.l.b16 %v62
  %v301 = vunpack.c.h.b16 %v62
  %v302 = vunpack.c.l.b16 %v63
  %v303 = vunpack.c.h.b16 %v63
  %v304 = vunpack.c.l.b16 %v64
  %v305 = vunpack.c.h.b16 %v64
  %v306 = vunpack.c.l.b16 %v65
  %v307 = vunpack.c.h.b16 %v65
  %v308 = vunpack.c.l.b16 %v66
  %v309 = vunpack.c.h.b16 %v66
  %v310 = vunpack.c.l.b16 %v67
  %v311 = vunpack.c.h.b16 %v67
  %v312 = vpack.c.b16 %v222, %v216
  %v313 = vpack.c.b16 %v223, %v217
  %v314 = vpack.c.b16 %v224, %v218
  %v315 = vpack.c.b16 %v225, %v219
  %v316 = vpack.c.b16 %v226, %v220
  %v317 = vpack.c.b16 %v227, %v221
  %v318 = vpack.c.b16 %v234, %v228
  %v319 = vpack.c.b16 %v235, %v229
  %v320 = vpack.c.b16 %v236, %v230
  %v321 = vpack.c.b16 %v237, %v231
  %v322 = vpack.c.b16 %v238, %v232
  %v323 = vpack.c.b16 %v239, %v233
  %v324 = vpack.c.b16 %v246, %v240
  %v325 = vpack.c.b16 %v247, %v241
  %v326 = vpack.c.b16 %v248, %v242
  %v327 = vpack.c.b16 %v249, %v243
  %v328 = vpack.c.b16 %v250, %v244
  %v329 = vpack.c.b16 %v251, %v245
  %v330 = vpack.c.b16 %v258, %v252
  %v331 = vpack.c.b16 %v259, %v253
  %v332 = vpack.c.b16 %v260, %v254
  %v333 = vpack.c.b16 %v261, %v255
  %v334 = vpack.c.b16 %v262, %v256
  %v335 = vpack.c.b16 %v263, %v257
  %v336 = vpack.c.b16 %v270, %v264
  %v337 = vpack.c.b16 %v271, %v265
  %v338 = vpack.c.b16 %v272, %v266
  %v339 = vpack.c.b16 %v273, %v267
  %v340 = vpack.c.b16 %v274, %v268
  %v341 = vpack.c.b16 %v275, %v269
  %v342 = vpack.c.b16 %v282, %v276
  %v343 = vpack.c.b16 %v283, %v277
  %v344 = vpack.c.b16 %v284, %v278
  %v345 = vpack.c.b16 %v285, %v279
  %v346 = vpack.c.b16 %v286, %v280
  %v347 = vpack.c.b16 %v287, %v281
  %v348 = vpack.c.b16 %v294, %v288
  %v349 = vpack.c.b16 %v295, %v289
  %v350 = vpack.c.b16 %v296, %v290
  %v351 = vpack.c.b16 %v297, %v291
  %v352 = vpack.c.b16 %v298, %v292
  %v353 = vpack.c.b16 %v299, %v293
  %v354 = vpack.c.b16 %v306, %v300
  %v355 = vpack.c.b16 %v307, %v301
  %v356 = vpack.c.b16 %v308, %v302
  %v357 = vpack.c.b16 %v309, %v303
  %v358 = vpack.c.b16 %v310, %v304
  %v359 = vpack.c.b16 %v311, %v305
  %v504 = vunpack.c.l.b16 %v68
  %v505 = vunpack.c.l.b16 %v69
  %v506 = vunpack.c.l.b16 %v70
  %v507 = vunpack.c.l.b16 %v71
  %v508 = vunpack.c.l.b16 %v72
  %v509 = vunpack.c.l.b16 %v73
  %v510 = vunpack.c.l.b16 %v74
  %v511 = vunpack.c.l.b16 %v75
  %v512 = vunpack.c.l.b16 %v76
  %v513 = vunpack.c.l.b16 %v77
  %v514 = vunpack.c.l.b16 %v78
  %v515 = vunpack.c.l.b16 %v79
  %v516 = vunpack.c.l.b16 %v80
  %v517 = vunpack.c.l.b16 %v81
  %v518 = vunpack.c.l.b16 %v82
  %v519 = vunpack.c.l.b16 %v83
  %v520 = vunpack.c.l.b16 %v84
  %v521 = vunpack.c.l.b16 %v85
  %v522 = vunpack.c.l.b16 %v86
  %v523 = vunpack.c.l.b16 %v87
  %v524 = vunpack.c.l.b16 %v88
  %v525 = vunpack.c.l.b16 %v89
  %v526 = vunpack.c.l.b16 %v90
  %v527 = vunpack.c.l.b16 %v91
  %v528 = vunpack.c.l.b16 %v92
  %v529 = vunpack.c.l.b16 %v93
  %v530 = vunpack.c.l.b16 %v94
  %v531 = vunpack.c.l.b16 %v95
  %v532 = vunpack.c.l.b16 %v96
  %v533 = vunpack.c.l.b16 %v97
  %v534 = vunpack.c.l.b16 %v98
  %v535 = vunpack.c.l.b16 %v99
  %v536 = vunpack.c.l.b16 %v100
  %v537 = vunpack.c.l.b16 %v101
  %v538 = vunpack.c.l.b16 %v102
  %v539 = vunpack.c.l.b16 %v103
  %v540 = vunpack.c.l.b16 %v104
  %v541 = vunpack.c.l.b16 %v105
  %v542 = vunpack.c.l.b16 %v106
  %v543 = vunpack.c.l.b16 %v107
  %v544 = vunpack.c.l.b16 %v108
  %v545 = vunpack.c.l.b16 %v109
  %v546 = vunpack.c.l.b16 %v110
  %v547 = vunpack.c.l.b16 %v111
  %v548 = vunpack.c.l.b16 %v112
  %v549 = vunpack.c.l.b16 %v113
  %v550 = vunpack.c.l.b16 %v114
  %v551 = vunpack.c.l.b16 %v115
  %v552 = vunpack.c.l.b16 %v116
  %v553 = vunpack.c.l.b16 %v117
  %v554 = vunpack.c.l.b16 %v118
  %v555 = vunpack.c.l.b16 %v119
  %v556 = vunpack.c.l.b16 %v120
  %v557 = vunpack.c.l.b16 %v121
  %v558 = vunpack.c.l.b16 %v122
  %v559 = vunpack.c.l.b16 %v123
  %v560 = vunpack.c.l.b16 %v124
  %v561 = vunpack.c.l.b16 %v125
  %v562 = vunpack.c.l.b16 %v126
  %v563 = vunpack.c.l.b16 %v127
  %v564 = vunpack.c.l.b16 %v128
  %v565 = vunpack.c.l.b16 %v129
  %v566 = vunpack.c.l.b16 %v130
  %v567 = vunpack.c.l.b16 %v131
  %v568 = vunpack.c.l.b16 %v132
  %v569 = vunpack.c.l.b16 %v133
  %v570 = vunpack.c.l.b16 %v134
  %v571 = vunpack.c.l.b16 %v135
  %v572 = vunpack.c.l.b16 %v136
  %v573 = vunpack.c.l.b16 %v137
  %v574 = vunpack.c.l.b16 %v138
  %v575 = vunpack.c.l.b16 %v139
  %v576 = vunpack.c.l.b16 %v140
  %v577 = vunpack.c.l.b16 %v141
  %v578 = vunpack.c.l.b16 %v142
  %v579 = vunpack.c.l.b16 %v143
  %v580 = vunpack.c.l.b16 %v144
  %v581 = vunpack.c.l.b16 %v145
  %v582 = vunpack.c.l.b16 %v146
  %v583 = vunpack.c.l.b16 %v147
  %v584 = vunpack.c.l.b16 %v148
  %v585 = vunpack.c.l.b16 %v149
  %v586 = vunpack.c.l.b16 %v150
  %v587 = vunpack.c.l.b16 %v151
  %v588 = vunpack.c.l.b16 %v152
  %v589 = vunpack.c.l.b16 %v153
  %v590 = vunpack.c.l.b16 %v154
  %v591 = vunpack.c.l.b16 %v155
  %v592 = vunpack.c.l.b16 %v156
  %v593 = vunpack.c.l.b16 %v157
  %v594 = vunpack.c.l.b16 %v158
  %v595 = vunpack.c.l.b16 %v159
  %v596 = vunpack.c.l.b16 %v160
  %v597 = vunpack.c.l.b16 %v161
  %v598 = vunpack.c.l.b16 %v162
  %v599 = vunpack.c.l.b16 %v163
  %v600 = vpack.c.b16 %v505, %v504
  %v601 = vpack.c.b16 %v507, %v506
  %v602 = vpack.c.b16 %v509, %v508
  %v603 = vpack.c.b16 %v511, %v510
  %v604 = vpack.c.b16 %v513, %v512
  %v605 = vpack.c.b16 %v515, %v514
  %v606 = vpack.c.b16 %v517, %v516
  %v607 = vpack.c.b16 %v519, %v518
  %v608 = vpack.c.b16 %v521, %v520
  %v609 = vpack.c.b16 %v523, %v522
  %v610 = vpack.c.b16 %v525, %v524
  %v611 = vpack.c.b16 %v527, %v526
  %v612 = vpack.c.b16 %v529, %v528
  %v613 = vpack.c.b16 %v531, %v530
  %v614 = vpack.c.b16 %v533, %v532
  %v615 = vpack.c.b16 %v535, %v534
  %v616 = vpack.c.b16 %v537, %v536
  %v617 = vpack.c.b16 %v539, %v538
  %v618 = vpack.c.b16 %v541, %v540
  %v619 = vpack.c.b16 %v543, %v542
  %v620 = vpack.c.b16 %v545, %v544
  %v621 = vpack.c.b16 %v547, %v546
  %v622 = vpack.c.b16 %v549, %v548
  %v623 = vpack.c.b16 %v551, %v550
  %v624 = vpack.c.b16 %v553, %v552
  %v625 = vpack.c.b16 %v555, %v554
  %v626 = vpack.c.b16 %v557, %v556
  %v627 = vpack.c.b16 %v559, %v558
  %v628 = vpack.c.b16 %v561, %v560
  %v629 = vpack.c.b16 %v563, %v562
  %v630 = vpack.c.b16 %v565, %v564
  %v631 = vpack.c.b16 %v567, %v566
  %v632 = vpack.c.b16 %v569, %v568
  %v633 = vpack.c.b16 %v571, %v570
  %v634 = vpack.c.b16 %v573, %v572
  %v635 = vpack.c.b16 %v575, %v574
  %v636 = vpack.c.b16 %v577, %v576
  %v637 = vpack.c.b16 %v579, %v578
  %v638 = vpack.c.b16 %v581, %v580
  %v639 = vpack.c.b16 %v583, %v582
  %v640 = vpack.c.b16 %v585, %v584
  %v641 = vpack.c.b16 %v587, %v586
  %v642 = vpack.c.b16 %v589, %v588
  %v643 = vpack.c.b16 %v591, %v590
  %v644 = vpack.c.b16 %v593, %v592
  %v645 = vpack.c.b16 %v595, %v594
  %v646 = vpack.c.b16 %v597, %v596
  %v647 = vpack.c.b16 %v599, %v598
  %696 = vmatpush.bf16.msra.mxu0 %v607
  %697 = vmatpush.bf16.msra.mxu0 %v606
  %698 = vmatpush.bf16.msra.mxu0 %v605
  %699 = vmatpush.bf16.msra.mxu0 %v604
  %700 = vmatpush.bf16.msra.mxu0 %v603
  %701 = vmatpush.bf16.msra.mxu0 %v602
  %702 = vmatpush.bf16.msra.mxu0 %v601
  %703 = vmatpush.bf16.msra.mxu0 %v600
  %704 = vmatmul.bf16.gmra.mxu0 %v312
  %v705 = vpop.f32.mrf.mxu0
  %v706 = vadd.f32 %v166, %v705
  %v707 = vpop.f32.mrf.mxu0
  %v708 = vadd.f32 %v166, %v707
  %709 = vmatmul.bf16.gmra.mxu0 %v318
  %v710 = vpop.f32.mrf.mxu0
  %v711 = vadd.f32 %v166, %v710
  %v712 = vpop.f32.mrf.mxu0
  %v713 = vadd.f32 %v166, %v712
  %714 = vmatmul.bf16.gmra.mxu0 %v324
  %v715 = vpop.f32.mrf.mxu0
  %v716 = vadd.f32 %v166, %v715
  %v717 = vpop.f32.mrf.mxu0
  %v718 = vadd.f32 %v166, %v717
  %719 = vmatmul.bf16.gmra.mxu0 %v330
  %v720 = vpop.f32.mrf.mxu0
  %v721 = vadd.f32 %v166, %v720
  %v722 = vpop.f32.mrf.mxu0
  %v723 = vadd.f32 %v166, %v722
  %724 = vmatmul.bf16.gmra.mxu0 %v336
  %v725 = vpop.f32.mrf.mxu0
  %v726 = vadd.f32 %v166, %v725
  %v727 = vpop.f32.mrf.mxu0
  %v728 = vadd.f32 %v166, %v727
  %729 = vmatmul.bf16.gmra.mxu0 %v342
  %v730 = vpop.f32.mrf.mxu0
  %v731 = vadd.f32 %v166, %v730
  %v732 = vpop.f32.mrf.mxu0
  %v733 = vadd.f32 %v166, %v732
  %734 = vmatmul.bf16.gmra.mxu0 %v348
  %v735 = vpop.f32.mrf.mxu0
  %v736 = vadd.f32 %v166, %v735
  %v737 = vpop.f32.mrf.mxu0
  %v738 = vadd.f32 %v166, %v737
  %739 = vmatmul.bf16.gmra.mxu0 %v354
  %v740 = vpop.f32.mrf.mxu0
  %v741 = vadd.f32 %v166, %v740
  %v742 = vpop.f32.mrf.mxu0
  %v743 = vadd.f32 %v166, %v742
  %744 = vdwg.mxu0
  %745 = vmatpush.bf16.msra.mxu0 %v615
  %746 = vmatpush.bf16.msra.mxu0 %v614
  %747 = vmatpush.bf16.msra.mxu0 %v613
  %748 = vmatpush.bf16.msra.mxu0 %v612
  %749 = vmatpush.bf16.msra.mxu0 %v611
  %750 = vmatpush.bf16.msra.mxu0 %v610
  %751 = vmatpush.bf16.msra.mxu0 %v609
  %752 = vmatpush.bf16.msra.mxu0 %v608
  %753 = vmatmul.bf16.gmra.mxu0 %v313
  %v754 = vpop.f32.mrf.mxu0
  %v755 = vadd.f32 %v706, %v754
  %v756 = vpop.f32.mrf.mxu0
  %v757 = vadd.f32 %v708, %v756
  %758 = vmatmul.bf16.gmra.mxu0 %v319
  %v759 = vpop.f32.mrf.mxu0
  %v760 = vadd.f32 %v711, %v759
  %v761 = vpop.f32.mrf.mxu0
  %v762 = vadd.f32 %v713, %v761
  %763 = vmatmul.bf16.gmra.mxu0 %v325
  %v764 = vpop.f32.mrf.mxu0
  %v765 = vadd.f32 %v716, %v764
  %v766 = vpop.f32.mrf.mxu0
  %v767 = vadd.f32 %v718, %v766
  %768 = vmatmul.bf16.gmra.mxu0 %v331
  %v769 = vpop.f32.mrf.mxu0
  %v770 = vadd.f32 %v721, %v769
  %v771 = vpop.f32.mrf.mxu0
  %v772 = vadd.f32 %v723, %v771
  %773 = vmatmul.bf16.gmra.mxu0 %v337
  %v774 = vpop.f32.mrf.mxu0
  %v775 = vadd.f32 %v726, %v774
  %v776 = vpop.f32.mrf.mxu0
  %v777 = vadd.f32 %v728, %v776
  %778 = vmatmul.bf16.gmra.mxu0 %v343
  %v779 = vpop.f32.mrf.mxu0
  %v780 = vadd.f32 %v731, %v779
  %v781 = vpop.f32.mrf.mxu0
  %v782 = vadd.f32 %v733, %v781
  %783 = vmatmul.bf16.gmra.mxu0 %v349
  %v784 = vpop.f32.mrf.mxu0
  %v785 = vadd.f32 %v736, %v784
  %v786 = vpop.f32.mrf.mxu0
  %v787 = vadd.f32 %v738, %v786
  %788 = vmatmul.bf16.gmra.mxu0 %v355
  %v789 = vpop.f32.mrf.mxu0
  %v790 = vadd.f32 %v741, %v789
  %v791 = vpop.f32.mrf.mxu0
  %v792 = vadd.f32 %v743, %v791
  %793 = vdwg.mxu0
  %794 = vmatpush.bf16.msra.mxu0 %v623
  %795 = vmatpush.bf16.msra.mxu0 %v622
  %796 = vmatpush.bf16.msra.mxu0 %v621
  %797 = vmatpush.bf16.msra.mxu0 %v620
  %798 = vmatpush.bf16.msra.mxu0 %v619
  %799 = vmatpush.bf16.msra.mxu0 %v618
  %800 = vmatpush.bf16.msra.mxu0 %v617
  %801 = vmatpush.bf16.msra.mxu0 %v616
  %802 = vmatmul.bf16.gmra.mxu0 %v314
  %v803 = vpop.f32.mrf.mxu0
  %v804 = vadd.f32 %v755, %v803
  %v805 = vpop.f32.mrf.mxu0
  %v806 = vadd.f32 %v757, %v805
  %807 = vmatmul.bf16.gmra.mxu0 %v320
  %v808 = vpop.f32.mrf.mxu0
  %v809 = vadd.f32 %v760, %v808
  %v810 = vpop.f32.mrf.mxu0
  %v811 = vadd.f32 %v762, %v810
  %812 = vmatmul.bf16.gmra.mxu0 %v326
  %v813 = vpop.f32.mrf.mxu0
  %v814 = vadd.f32 %v765, %v813
  %v815 = vpop.f32.mrf.mxu0
  %v816 = vadd.f32 %v767, %v815
  %817 = vmatmul.bf16.gmra.mxu0 %v332
  %v818 = vpop.f32.mrf.mxu0
  %v819 = vadd.f32 %v770, %v818
  %v820 = vpop.f32.mrf.mxu0
  %v821 = vadd.f32 %v772, %v820
  %822 = vmatmul.bf16.gmra.mxu0 %v338
  %v823 = vpop.f32.mrf.mxu0
  %v824 = vadd.f32 %v775, %v823
  %v825 = vpop.f32.mrf.mxu0
  %v826 = vadd.f32 %v777, %v825
  %827 = vmatmul.bf16.gmra.mxu0 %v344
  %v828 = vpop.f32.mrf.mxu0
  %v829 = vadd.f32 %v780, %v828
  %v830 = vpop.f32.mrf.mxu0
  %v831 = vadd.f32 %v782, %v830
  %832 = vmatmul.bf16.gmra.mxu0 %v350
  %v833 = vpop.f32.mrf.mxu0
  %v834 = vadd.f32 %v785, %v833
  %v835 = vpop.f32.mrf.mxu0
  %v836 = vadd.f32 %v787, %v835
  %837 = vmatmul.bf16.gmra.mxu0 %v356
  %v838 = vpop.f32.mrf.mxu0
  %v839 = vadd.f32 %v790, %v838
  %v840 = vpop.f32.mrf.mxu0
  %v841 = vadd.f32 %v792, %v840
  %842 = vdwg.mxu0
  %843 = vmatpush.bf16.msra.mxu0 %v631
  %844 = vmatpush.bf16.msra.mxu0 %v630
  %845 = vmatpush.bf16.msra.mxu0 %v629
  %846 = vmatpush.bf16.msra.mxu0 %v628
  %847 = vmatpush.bf16.msra.mxu0 %v627
  %848 = vmatpush.bf16.msra.mxu0 %v626
  %849 = vmatpush.bf16.msra.mxu0 %v625
  %850 = vmatpush.bf16.msra.mxu0 %v624
  %851 = vmatmul.bf16.gmra.mxu0 %v315
  %v852 = vpop.f32.mrf.mxu0
  %v853 = vadd.f32 %v804, %v852
  %v854 = vpop.f32.mrf.mxu0
  %v855 = vadd.f32 %v806, %v854
  %856 = vmatmul.bf16.gmra.mxu0 %v321
  %v857 = vpop.f32.mrf.mxu0
  %v858 = vadd.f32 %v809, %v857
  %v859 = vpop.f32.mrf.mxu0
  %v860 = vadd.f32 %v811, %v859
  %861 = vmatmul.bf16.gmra.mxu0 %v327
  %v862 = vpop.f32.mrf.mxu0
  %v863 = vadd.f32 %v814, %v862
  %v864 = vpop.f32.mrf.mxu0
  %v865 = vadd.f32 %v816, %v864
  %866 = vmatmul.bf16.gmra.mxu0 %v333
  %v867 = vpop.f32.mrf.mxu0
  %v868 = vadd.f32 %v819, %v867
  %v869 = vpop.f32.mrf.mxu0
  %v870 = vadd.f32 %v821, %v869
  %871 = vmatmul.bf16.gmra.mxu0 %v339
  %v872 = vpop.f32.mrf.mxu0
  %v873 = vadd.f32 %v824, %v872
  %v874 = vpop.f32.mrf.mxu0
  %v875 = vadd.f32 %v826, %v874
  %876 = vmatmul.bf16.gmra.mxu0 %v345
  %v877 = vpop.f32.mrf.mxu0
  %v878 = vadd.f32 %v829, %v877
  %v879 = vpop.f32.mrf.mxu0
  %v880 = vadd.f32 %v831, %v879
  %881 = vmatmul.bf16.gmra.mxu0 %v351
  %v882 = vpop.f32.mrf.mxu0
  %v883 = vadd.f32 %v834, %v882
  %v884 = vpop.f32.mrf.mxu0
  %v885 = vadd.f32 %v836, %v884
  %886 = vmatmul.bf16.gmra.mxu0 %v357
  %v887 = vpop.f32.mrf.mxu0
  %v888 = vadd.f32 %v839, %v887
  %v889 = vpop.f32.mrf.mxu0
  %v890 = vadd.f32 %v841, %v889
  %891 = vdwg.mxu0
  %892 = vmatpush.bf16.msra.mxu0 %v639
  %893 = vmatpush.bf16.msra.mxu0 %v638
  %894 = vmatpush.bf16.msra.mxu0 %v637
  %895 = vmatpush.bf16.msra.mxu0 %v636
  %896 = vmatpush.bf16.msra.mxu0 %v635
  %897 = vmatpush.bf16.msra.mxu0 %v634
  %898 = vmatpush.bf16.msra.mxu0 %v633
  %899 = vmatpush.bf16.msra.mxu0 %v632
  %900 = vmatmul.bf16.gmra.mxu0 %v316
  %v901 = vpop.f32.mrf.mxu0
  %v902 = vadd.f32 %v853, %v901
  %v903 = vpop.f32.mrf.mxu0
  %v904 = vadd.f32 %v855, %v903
  %905 = vmatmul.bf16.gmra.mxu0 %v322
  %v906 = vpop.f32.mrf.mxu0
  %v907 = vadd.f32 %v858, %v906
  %v908 = vpop.f32.mrf.mxu0
  %v909 = vadd.f32 %v860, %v908
  %910 = vmatmul.bf16.gmra.mxu0 %v328
  %v911 = vpop.f32.mrf.mxu0
  %v912 = vadd.f32 %v863, %v911
  %v913 = vpop.f32.mrf.mxu0
  %v914 = vadd.f32 %v865, %v913
  %915 = vmatmul.bf16.gmra.mxu0 %v334
  %v916 = vpop.f32.mrf.mxu0
  %v917 = vadd.f32 %v868, %v916
  %v918 = vpop.f32.mrf.mxu0
  %v919 = vadd.f32 %v870, %v918
  %920 = vmatmul.bf16.gmra.mxu0 %v340
  %v921 = vpop.f32.mrf.mxu0
  %v922 = vadd.f32 %v873, %v921
  %v923 = vpop.f32.mrf.mxu0
  %v924 = vadd.f32 %v875, %v923
  %925 = vmatmul.bf16.gmra.mxu0 %v346
  %v926 = vpop.f32.mrf.mxu0
  %v927 = vadd.f32 %v878, %v926
  %v928 = vpop.f32.mrf.mxu0
  %v929 = vadd.f32 %v880, %v928
  %930 = vmatmul.bf16.gmra.mxu0 %v352
  %v931 = vpop.f32.mrf.mxu0
  %v932 = vadd.f32 %v883, %v931
  %v933 = vpop.f32.mrf.mxu0
  %v934 = vadd.f32 %v885, %v933
  %935 = vmatmul.bf16.gmra.mxu0 %v358
  %v936 = vpop.f32.mrf.mxu0
  %v937 = vadd.f32 %v888, %v936
  %v938 = vpop.f32.mrf.mxu0
  %v939 = vadd.f32 %v890, %v938
  %940 = vdwg.mxu0
  %941 = vmatpush.bf16.msra.mxu0 %v647
  %942 = vmatpush.bf16.msra.mxu0 %v646
  %943 = vmatpush.bf16.msra.mxu0 %v645
  %944 = vmatpush.bf16.msra.mxu0 %v644
  %945 = vmatpush.bf16.msra.mxu0 %v643
  %946 = vmatpush.bf16.msra.mxu0 %v642
  %947 = vmatpush.bf16.msra.mxu0 %v641
  %948 = vmatpush.bf16.msra.mxu0 %v640
  %949 = vmatmul.bf16.gmra.mxu0 %v317
  %v950 = vpop.f32.mrf.mxu0
  %v951 = vadd.f32 %v902, %v950
  %v952 = vpop.f32.mrf.mxu0
  %v953 = vadd.f32 %v904, %v952
  %954 = vmatmul.bf16.gmra.mxu0 %v323
  %v955 = vpop.f32.mrf.mxu0
  %v956 = vadd.f32 %v907, %v955
  %v957 = vpop.f32.mrf.mxu0
  %v958 = vadd.f32 %v909, %v957
  %959 = vmatmul.bf16.gmra.mxu0 %v329
  %v960 = vpop.f32.mrf.mxu0
  %v961 = vadd.f32 %v912, %v960
  %v962 = vpop.f32.mrf.mxu0
  %v963 = vadd.f32 %v914, %v962
  %964 = vmatmul.bf16.gmra.mxu0 %v335
  %v965 = vpop.f32.mrf.mxu0
  %v966 = vadd.f32 %v917, %v965
  %v967 = vpop.f32.mrf.mxu0
  %v968 = vadd.f32 %v919, %v967
  %969 = vmatmul.bf16.gmra.mxu0 %v341
  %v970 = vpop.f32.mrf.mxu0
  %v971 = vadd.f32 %v922, %v970
  %v972 = vpop.f32.mrf.mxu0
  %v973 = vadd.f32 %v924, %v972
  %974 = vmatmul.bf16.gmra.mxu0 %v347
  %v975 = vpop.f32.mrf.mxu0
  %v976 = vadd.f32 %v927, %v975
  %v977 = vpop.f32.mrf.mxu0
  %v978 = vadd.f32 %v929, %v977
  %979 = vmatmul.bf16.gmra.mxu0 %v353
  %v980 = vpop.f32.mrf.mxu0
  %v981 = vadd.f32 %v932, %v980
  %v982 = vpop.f32.mrf.mxu0
  %v983 = vadd.f32 %v934, %v982
  %984 = vmatmul.bf16.gmra.mxu0 %v359
  %v985 = vpop.f32.mrf.mxu0
  %v986 = vadd.f32 %v937, %v985
  %v987 = vpop.f32.mrf.mxu0
  %v988 = vadd.f32 %v939, %v987
  %989 = vdwg.mxu0
  %v990 = vmax.f32 %v951, 0.0
  %v991 = vmax.f32 %v953, 0.0
  %v992 = vmax.f32 %v956, 0.0
  %v993 = vmax.f32 %v958, 0.0
  %v994 = vmax.f32 %v961, 0.0
  %v995 = vmax.f32 %v963, 0.0
  %v996 = vmax.f32 %v966, 0.0
  %v997 = vmax.f32 %v968, 0.0
  %v998 = vmax.f32 %v971, 0.0
  %v999 = vmax.f32 %v973, 0.0
  %v1000 = vmax.f32 %v976, 0.0
  %v1001 = vmax.f32 %v978, 0.0
  %v1002 = vmax.f32 %v981, 0.0
  %v1003 = vmax.f32 %v983, 0.0
  %v1004 = vmax.f32 %v986, 0.0
  %v1005 = vmax.f32 %v988, 0.0
  %v1006 = vld [vmem:[%s3] sm:$0xff]
  %v1007 = vld [vmem:[%s4] sm:$0xff]
  %1009 = vset.pattern.permute.xlu0 0
  %1010 = vperm.xlu0 %1009, %v1007
  %v1011 = vpop.permute.xlu0 %1010
  %1013 = vmatpush.xpose.msra.mxu0 %v1005
  %1014 = vmatpush.xpose.msra.mxu0 %v1004
  %1015 = vmatpush.xpose.msra.mxu0 %v1003
  %1016 = vmatpush.xpose.msra.mxu0 %v1002
  %1017 = vmatpush.xpose.msra.mxu0 %v1001
  %1018 = vmatpush.xpose.msra.mxu0 %v1000
  %1019 = vmatpush.xpose.msra.mxu0 %v999
  %1020 = vmatpush.xpose.msra.mxu0 %v998
  %1021 = vmatpush.xpose.msra.mxu0 %v997
  %1022 = vmatpush.xpose.msra.mxu0 %v996
  %1023 = vmatpush.xpose.msra.mxu0 %v995
  %1024 = vmatpush.xpose.msra.mxu0 %v994
  %1025 = vmatpush.xpose.msra.mxu0 %v993
  %1026 = vmatpush.xpose.msra.mxu0 %v992
  %1027 = vmatpush.xpose.msra.mxu0 %v991
  %1028 = vmatpush.xpose.msra.mxu0 %v990
  %1029 = vmatmul.f32.gmra.mxu0 %v1006
  %v1030 = vpop.f32.mrf.mxu0
  %v1031 = vadd.f32 %v1011, %v1030
  %1032 = vdwg.mxu0
  %v1033 = vmax.f32 %v1031, 0.0
  %v1035 = vrot.slane %v1033, 7
  %vm1037 = vcmp.gt.f32.partialorder %v1031, %v1035
  %v1038 = vsel %vm1037, 1, 0
  %1039 = vst [vmem:[%s5 - $0x1] sm:$0x2] %v1038
  // Predicated region
  $region22: #{model_forward.1} parent=0 // pred_check
    _
  $region23: #{model_forward.1} parent=0 // pred_check_branch
    %1041 = sbr.rel (0) target = $region25
  $region24: #{model_forward.1} parent=0 // pred_region
    _
  $region25: #{model_forward.1} parent=0 // pred_fallthru
    _
  // Predicated region
  $region26: #{model_forward.1} parent=0 // pred_check
    _
  $region27: #{model_forward.1} parent=0 // pred_check_branch
    %1043 = sbr.rel (0) target = $region29
  $region28: #{model_forward.1} parent=0 // pred_region
    _
  $region29: #{model_forward.1} parent=0 // pred_fallthru
    _

</llo_original>
